<compile_context>
chip_gen: v6e
topology: v6e:2x2x1
jax: 0.10.0
libtpu: 0.0.40
codegen_flags: <defaults>
</compile_context>

<pallas_src>
import functools
import math

import jax
import jax.numpy as jnp
from jax.experimental import pallas as pl
from jax.experimental.pallas import tpu as pltpu

_ROW = 1024            # lane-dense row width (8 vregs wide)
_MAX_BLOCK_ROWS = 512  # 512 x 1024 f32 = 2 MiB per input per pipeline buffer


def _my_loss_kernel(yhat_ref, y_ref, err_ref, cor_ref, *, block_rows):
    k = pl.program_id(1)

    @pl.when(k == 0)
    def _init():
        err_ref[...] = jnp.zeros_like(err_ref)
        cor_ref[...] = jnp.zeros_like(cor_ref)

    yhat = yhat_ref[...].astype(jnp.float32)   # (block_rows, 1024)
    y = y_ref[...].astype(jnp.float32)

    diff = yhat - y
    err = jnp.log(diff * diff + 1.0)           # log((yHat - y)^2 + 1), EUP op

    # sign(yHat) == sign(y) via a single product test (zero/zero is a match).
    match = jnp.where((yhat * y > 0.0) | ((yhat == 0.0) & (y == 0.0)),
                      jnp.float32(1.0), jnp.float32(0.0))

    # Reduce the slab to (8, 1024) with VPU-only axis-0 adds, then do a single
    # read-modify-write of each persistent accumulator (= output block).
    r = block_rows // 8
    err_ref[...] += jnp.sum(err.reshape(r, 8, _ROW), axis=0).reshape(1, 8, _ROW)
    cor_ref[...] += jnp.sum(match.reshape(r, 8, _ROW), axis=0).reshape(1, 8, _ROW)


def _my_loss_impl(yhat, y):
    """Pallas implementation of myLoss.forward(yHat, y) for 1-D inputs."""
    assert yhat.shape == y.shape and yhat.ndim == 1
    n = int(y.shape[0])

    rows = -(-n // _ROW)                                    # ceil(n / 1024)
    block_rows = min(_MAX_BLOCK_ROWS, ((rows + 7) // 8) * 8)
    num_blocks = -(-rows // block_rows)
    num_shards = 2 if num_blocks >= 2 else 1                # v7x has 2 TCs
    blocks_per_shard = -(-num_blocks // num_shards)
    padded_rows = num_shards * blocks_per_shard * block_rows
    padded_n = padded_rows * _ROW
    pad = padded_n - n

    if pad:
        yhat = jnp.concatenate([yhat, jnp.zeros((pad,), dtype=yhat.dtype)])
        y = jnp.concatenate([y, jnp.zeros((pad,), dtype=y.dtype)])
    yhat2 = yhat.reshape(padded_rows, _ROW)
    y2 = y.reshape(padded_rows, _ROW)

    kernel = functools.partial(_my_loss_kernel, block_rows=block_rows)

    in_map = lambda s, k: (s * blocks_per_shard + k, 0)
    out_map = lambda s, k: (s, 0, 0)

    err_part, cor_part = pl.pallas_call(
        kernel,
        out_shape=(
            jax.ShapeDtypeStruct((num_shards, 8, _ROW), jnp.float32),
            jax.ShapeDtypeStruct((num_shards, 8, _ROW), jnp.float32),
        ),
        grid=(num_shards, blocks_per_shard),
        in_specs=[
            pl.BlockSpec((block_rows, _ROW), in_map),
            pl.BlockSpec((block_rows, _ROW), in_map),
        ],
        out_specs=(
            pl.BlockSpec((1, 8, _ROW), out_map),
            pl.BlockSpec((1, 8, _ROW), out_map),
        ),
        compiler_params=pltpu.CompilerParams(
            dimension_semantics=("parallel", "arbitrary")),
    )(yhat2, y2)

    # Tiny finalize in XLA: combine shard partials, subtract the sign-matches
    # contributed by the zero padding, apply the sigmoid factor.
    n_f = jnp.float32(n)
    error_sq = jnp.sum(err_part)
    num_cor = jnp.sum(cor_part) - jnp.float32(pad)
    num_inc = n_f - num_cor
    factor = jax.nn.sigmoid(num_inc / num_cor - 1.3)
    return error_sq * factor / n_f


my_loss = jax.jit(_my_loss_impl)


def _my_loss_ref(yhat, y):
    """Pure-JAX reference mirroring the PyTorch forward."""
    yhat = yhat.astype(jnp.float32)
    y = y.astype(jnp.float32)
    error_sq = jnp.sum(jnp.log(jnp.square(yhat - y) + 1.0))
    n = jnp.float32(y.shape[0])
    num_cor = jnp.sum((jnp.sign(yhat) == jnp.sign(y)).astype(jnp.float32))
    num_inc = n - num_cor
    factor = jax.nn.sigmoid(num_inc / num_cor - 1.3)
    return error_sq * factor / n


if __name__ == "__main__":
    key = jax.random.PRNGKey(0)
    k1, k2 = jax.random.split(key)
    N = 2048  # batch size (y.size(0)); deliberately NOT a multiple of the block
    yhat = jax.random.normal(k1, (N,), dtype=jnp.float32)
    y = jax.random.normal(k2, (N,), dtype=jnp.float32)

    res = my_loss(yhat, y)
    res = jax.block_until_ready(res)

    # mirrors `assert not math.isnan(res)` in the PyTorch module
    assert not math.isnan(float(res))

    ref = jax.block_until_ready(_my_loss_ref(yhat, y))
    assert jnp.allclose(res, ref, rtol=1e-5, atol=1e-5), (float(res), float(ref))

    print("KERNEL_OK")
</pallas_src>

<mosaic_0001>
module attributes {stable_mosaic.version = 11 : i64} {
  func.func @_my_loss_kernel(%arg0: i32, %arg1: i32, %arg2: memref<8x1024xf32, #tpu.memory_space<vmem>>, %arg3: memref<8x1024xf32, #tpu.memory_space<vmem>>, %arg4: memref<1x8x1024xf32, #tpu.memory_space<vmem>>, %arg5: memref<1x8x1024xf32, #tpu.memory_space<vmem>>) attributes {dimension_semantics = [#tpu.dimension_semantics<parallel>, #tpu.dimension_semantics<arbitrary>], iteration_bounds = array<i64: 1, 1>, scalar_prefetch = 0 : i64, scratch_operands = 0 : i64, tpu.core_type = #tpu.core_type<tc>, window_params = [{transform_indices = @transform_0, window_bounds = array<i64: 8, 1024>}, {transform_indices = @transform_1, window_bounds = array<i64: 8, 1024>}, {transform_indices = @transform_2, window_bounds = array<i64: 1, 8, 1024>}, {transform_indices = @transform_3, window_bounds = array<i64: 1, 8, 1024>}]} {
    %c0_i32 = arith.constant 0 : i32
    %0 = arith.cmpi eq, %arg1, %c0_i32 : i32
    %1 = arith.extui %0 : i1 to i32
    %c0_i32_0 = arith.constant 0 : i32
    %2 = arith.cmpi ne, %1, %c0_i32_0 : i32
    scf.if %2 {
      %cst_23 = arith.constant 0.000000e+00 : f32
      %34 = vector.broadcast %cst_23 : f32 to vector<1x8x1024xf32>
      %c0_24 = arith.constant 0 : index
      %c0_25 = arith.constant 0 : index
      %c0_26 = arith.constant 0 : index
      %35 = vector.load %arg4[%c0_24, %c0_25, %c0_26] : memref<1x8x1024xf32, #tpu.memory_space<vmem>>, vector<1x8x1024xf32>
      tpu.vector_store %arg4[%c0_24, %c0_25, %c0_26], %34 {strides = array<i32>} : memref<1x8x1024xf32, #tpu.memory_space<vmem>>, vector<1x8x1024xf32>,
      %cst_27 = arith.constant 0.000000e+00 : f32
      %36 = vector.broadcast %cst_27 : f32 to vector<1x8x1024xf32>
      %c0_28 = arith.constant 0 : index
      %c0_29 = arith.constant 0 : index
      %c0_30 = arith.constant 0 : index
      %37 = vector.load %arg5[%c0_28, %c0_29, %c0_30] : memref<1x8x1024xf32, #tpu.memory_space<vmem>>, vector<1x8x1024xf32>
      tpu.vector_store %arg5[%c0_28, %c0_29, %c0_30], %36 {strides = array<i32>} : memref<1x8x1024xf32, #tpu.memory_space<vmem>>, vector<1x8x1024xf32>,
    } else {
    }
    %c0 = arith.constant 0 : index
    %c0_1 = arith.constant 0 : index
    %3 = vector.load %arg2[%c0, %c0_1] : memref<8x1024xf32, #tpu.memory_space<vmem>>, vector<8x1024xf32>
    %c0_2 = arith.constant 0 : index
    %c0_3 = arith.constant 0 : index
    %4 = vector.load %arg3[%c0_2, %c0_3] : memref<8x1024xf32, #tpu.memory_space<vmem>>, vector<8x1024xf32>
    %5 = arith.subf %3, %4 : vector<8x1024xf32>
    %6 = arith.mulf %5, %5 : vector<8x1024xf32>
    %cst = arith.constant 1.000000e+00 : f32
    %7 = vector.broadcast %cst : f32 to vector<8x1024xf32>
    %8 = arith.addf %6, %7 : vector<8x1024xf32>
    %9 = math.log %8 : vector<8x1024xf32>
    %10 = arith.mulf %3, %4 : vector<8x1024xf32>
    %cst_4 = arith.constant 0.000000e+00 : f32
    %11 = vector.broadcast %cst_4 : f32 to vector<8x1024xf32>
    %12 = arith.cmpf ogt, %10, %11 : vector<8x1024xf32>
    %cst_5 = arith.constant 0.000000e+00 : f32
    %13 = vector.broadcast %cst_5 : f32 to vector<8x1024xf32>
    %14 = arith.cmpf oeq, %3, %13 : vector<8x1024xf32>
    %cst_6 = arith.constant 0.000000e+00 : f32
    %15 = vector.broadcast %cst_6 : f32 to vector<8x1024xf32>
    %16 = arith.cmpf oeq, %4, %15 : vector<8x1024xf32>
    %17 = arith.andi %14, %16 : vector<8x1024xi1>
    %18 = arith.ori %12, %17 : vector<8x1024xi1>
    %cst_7 = arith.constant 1.000000e+00 : f32
    %cst_8 = arith.constant 0.000000e+00 : f32
    %19 = vector.broadcast %cst_7 : f32 to vector<8x1024xf32>
    %20 = vector.broadcast %cst_8 : f32 to vector<8x1024xf32>
    %21 = arith.select %18, %19, %20 : vector<8x1024xi1>, vector<8x1024xf32>
    %c0_9 = arith.constant 0 : index
    %c0_10 = arith.constant 0 : index
    %c0_11 = arith.constant 0 : index
    %22 = vector.load %arg4[%c0_9, %c0_10, %c0_11] : memref<1x8x1024xf32, #tpu.memory_space<vmem>>, vector<1x8x1024xf32>
    %23 = vector.shape_cast %9 : vector<8x1024xf32> to vector<1x8x1024xf32>
    %cst_12 = arith.constant dense<0.000000e+00> : vector<8x1024xf32>
    %24 = vector.multi_reduction <add>, %23, %cst_12 [0] : vector<1x8x1024xf32> to vector<8x1024xf32>
    %25 = vector.shape_cast %24 : vector<8x1024xf32> to vector<1x8x1024xf32>
    %26 = arith.addf %22, %25 : vector<1x8x1024xf32>
    %c0_13 = arith.constant 0 : index
    %c0_14 = arith.constant 0 : index
    %c0_15 = arith.constant 0 : index
    %27 = vector.load %arg4[%c0_13, %c0_14, %c0_15] : memref<1x8x1024xf32, #tpu.memory_space<vmem>>, vector<1x8x1024xf32>
    tpu.vector_store %arg4[%c0_13, %c0_14, %c0_15], %26 {strides = array<i32>} : memref<1x8x1024xf32, #tpu.memory_space<vmem>>, vector<1x8x1024xf32>,
    %c0_16 = arith.constant 0 : index
    %c0_17 = arith.constant 0 : index
    %c0_18 = arith.constant 0 : index
    %28 = vector.load %arg5[%c0_16, %c0_17, %c0_18] : memref<1x8x1024xf32, #tpu.memory_space<vmem>>, vector<1x8x1024xf32>
    %29 = vector.shape_cast %21 : vector<8x1024xf32> to vector<1x8x1024xf32>
    %cst_19 = arith.constant dense<0.000000e+00> : vector<8x1024xf32>
    %30 = vector.multi_reduction <add>, %29, %cst_19 [0] : vector<1x8x1024xf32> to vector<8x1024xf32>
    %31 = vector.shape_cast %30 : vector<8x1024xf32> to vector<1x8x1024xf32>
    %32 = arith.addf %28, %31 : vector<1x8x1024xf32>
    %c0_20 = arith.constant 0 : index
    %c0_21 = arith.constant 0 : index
    %c0_22 = arith.constant 0 : index
    %33 = vector.load %arg5[%c0_20, %c0_21, %c0_22] : memref<1x8x1024xf32, #tpu.memory_space<vmem>>, vector<1x8x1024xf32>
    tpu.vector_store %arg5[%c0_20, %c0_21, %c0_22], %32 {strides = array<i32>} : memref<1x8x1024xf32, #tpu.memory_space<vmem>>, vector<1x8x1024xf32>,
    return
  }
  func.func @transform_0(%arg0: i32, %arg1: i32) -> (i32, i32) {
    %c1_i32 = arith.constant 1 : i32
    %0 = arith.muli %arg0, %c1_i32 : i32
    %1 = arith.addi %0, %arg1 : i32
    %c0_i32 = arith.constant 0 : i32
    %c0_i32_0 = arith.constant 0 : i32
    return %1, %c0_i32 : i32, i32
  }
  func.func @transform_1(%arg0: i32, %arg1: i32) -> (i32, i32) {
    %c1_i32 = arith.constant 1 : i32
    %0 = arith.muli %arg0, %c1_i32 : i32
    %1 = arith.addi %0, %arg1 : i32
    %c0_i32 = arith.constant 0 : i32
    %c0_i32_0 = arith.constant 0 : i32
    return %1, %c0_i32 : i32, i32
  }
  func.func @transform_2(%arg0: i32, %arg1: i32) -> (i32, i32, i32) {
    %c0_i32 = arith.constant 0 : i32
    %c0_i32_0 = arith.constant 0 : i32
    %c0_i32_1 = arith.constant 0 : i32
    return %arg0, %c0_i32, %c0_i32_0 : i32, i32, i32
  }
  func.func @transform_3(%arg0: i32, %arg1: i32) -> (i32, i32, i32) {
    %c0_i32 = arith.constant 0 : i32
    %c0_i32_0 = arith.constant 0 : i32
    %c0_i32_1 = arith.constant 0 : i32
    return %arg0, %c0_i32, %c0_i32_0 : i32, i32, i32
  }
}

</mosaic_0001>

<llo_original>
// kernel: _my_loss_impl.1
$region0: #{_my_loss_impl.1}
  #allocation0 [shape = 'u32[]', space=smem, size = 0x4, offset = 0x4, fixed_abs, tag = 'smem constant byte address 0x4 - core index']
  #allocation1 [shape = 'u32[144,128]{1,0:T(1,128)}', space=vmem, size = 0x12000, scoped, tag = 'internal scratch']
  %s0 = inlined_call_operand.vmem [shape: f32[8,1024], index: 0, kind: input, shape index: {}]
  %s1 = inlined_call_operand.vmem [shape: f32[8,1024], index: 1, kind: input, shape index: {}]
  %s2 = inlined_call_operand.vmem [shape: f32[1,8,1024], index: 2, kind: output, shape index: {0}]
  %s3 = inlined_call_operand.vmem [shape: f32[1,8,1024], index: 3, kind: output, shape index: {1}]
  %4 = xla_tuple %s2, %s3
  %s5 = sld [smem:[#allocation0]]
  $region30: #{_my_loss_impl.1} parent=0
    _
  %s7 = ssub.s32 1, %s5
  %s8 = scalar_select 0, %s7, %s5
  // Predicated region
  $region2: #{_my_loss_impl.1} parent=0 // pred_check
    _
  $region3: #{_my_loss_impl.1} parent=0 // pred_check_branch
    %10 = sbr.rel (0) target = $region5
  $region4: #{_my_loss_impl.1} parent=0 // pred_region
    %s11 = sadd.s32 0, 0
    %p12 = scmp.lt.s32.totalorder %s11, 0
    %s13 = scalar_select %p12, %s11, 0
    %s14 = smul.addr %s13, 8
    %s15 = smul.addr %s14, 8
    %s16 = scalar_lea.vmem %s0, %s15
    %s17 = sadd.s32 0, 0
  $region5: #{_my_loss_impl.1} parent=0 // pred_fallthru
    _
  // Predicated region
  $region6: #{_my_loss_impl.1} parent=0 // pred_check
    _
  $region7: #{_my_loss_impl.1} parent=0 // pred_check_branch
    %19 = sbr.rel (0) target = $region9
  $region8: #{_my_loss_impl.1} parent=0 // pred_region
    %s20 = sadd.s32 0, 0
    %p21 = scmp.lt.s32.totalorder %s20, 0
    %s22 = scalar_select %p21, %s20, 0
    %s23 = smul.addr %s22, 8
    %s24 = smul.addr %s23, 8
    %s25 = scalar_lea.vmem %s1, %s24
    %s26 = sadd.s32 0, 0
  $region9: #{_my_loss_impl.1} parent=0 // pred_fallthru
    _
  %s27 = sadd.s32 0, 0
  %p28 = scmp.lt.s32.totalorder %s27, 0
  %s29 = scalar_select %p28, %s27, 0
  %s30 = smul.addr %s29, 8
  %s31 = smul.addr %s30, 8
  %s32 = scalar_lea.vmem %s0, %s31
  %s33 = sadd.s32 0, 0
  %p34 = scmp.lt.s32.totalorder %s33, 0
  %s35 = scalar_select %p34, %s33, 0
  %s36 = smul.addr %s35, 8
  %s37 = smul.addr %s36, 8
  %s38 = scalar_lea.vmem %s1, %s37
  %s39 = sadd.s32 0, 0
  %p40 = scmp.lt.s32.totalorder %s39, 0
  %s41 = scalar_select %p40, %s39, 0
  %s42 = smul.addr %s41, 8
  %s43 = smul.addr %s42, 8
  %s44 = scalar_lea.vmem %s0, %s43
  %s45 = sadd.s32 0, 0
  %s46 = sadd.s32 0, 0
  %p47 = scmp.lt.s32.totalorder %s46, 0
  %s48 = scalar_select %p47, %s46, 0
  %s49 = smul.addr %s48, 8
  %s50 = smul.addr %s49, 8
  %s51 = scalar_lea.vmem %s1, %s50
  %s52 = sadd.s32 0, 0
  %p53 = scmp.eq.s32.totalorder 0, 0
  // Predicated region
  $region10: #{_my_loss_impl.1} parent=0 // pred_check
    %p54 = pneg %p53
  $region11: #{_my_loss_impl.1} parent=0 // pred_check_branch
    %56 = sbr.rel (%p54) target = $region13
  $region12: #{_my_loss_impl.1} parent=0 // pred_region
    %57 = vst [vmem:[%s2] sm:$0xff] 0.0
    %58 = vst [vmem:[%s2 + $0x8] sm:$0xff] 0.0
    %59 = vst [vmem:[%s2 + $0x10] sm:$0xff] 0.0
    %60 = vst [vmem:[%s2 + $0x18] sm:$0xff] 0.0
    %61 = vst [vmem:[%s2 + $0x20] sm:$0xff] 0.0
    %62 = vst [vmem:[%s2 + $0x28] sm:$0xff] 0.0
    %63 = vst [vmem:[%s2 + $0x30] sm:$0xff] 0.0
    %64 = vst [vmem:[%s2 + $0x38] sm:$0xff] 0.0
    %65 = vst [vmem:[%s3] sm:$0xff] 0.0
    %66 = vst [vmem:[%s3 + $0x8] sm:$0xff] 0.0
    %67 = vst [vmem:[%s3 + $0x10] sm:$0xff] 0.0
    %68 = vst [vmem:[%s3 + $0x18] sm:$0xff] 0.0
    %69 = vst [vmem:[%s3 + $0x20] sm:$0xff] 0.0
    %70 = vst [vmem:[%s3 + $0x28] sm:$0xff] 0.0
    %71 = vst [vmem:[%s3 + $0x30] sm:$0xff] 0.0
    %72 = vst [vmem:[%s3 + $0x38] sm:$0xff] 0.0
  $region13: #{_my_loss_impl.1} parent=0 // pred_fallthru
    _
  %v73 = vld [vmem:[%s44] sm:$0xff]
  %v74 = vld [vmem:[%s44 + $0x8] sm:$0xff]
  %v75 = vld [vmem:[%s44 + $0x10] sm:$0xff]
  %v76 = vld [vmem:[%s44 + $0x18] sm:$0xff]
  %v77 = vld [vmem:[%s44 + $0x20] sm:$0xff]
  %v78 = vld [vmem:[%s44 + $0x28] sm:$0xff]
  %v79 = vld [vmem:[%s44 + $0x30] sm:$0xff]
  %v80 = vld [vmem:[%s44 + $0x38] sm:$0xff]
  %v81 = vld [vmem:[%s51] sm:$0xff]
  %v82 = vld [vmem:[%s51 + $0x8] sm:$0xff]
  %v83 = vld [vmem:[%s51 + $0x10] sm:$0xff]
  %v84 = vld [vmem:[%s51 + $0x18] sm:$0xff]
  %v85 = vld [vmem:[%s51 + $0x20] sm:$0xff]
  %v86 = vld [vmem:[%s51 + $0x28] sm:$0xff]
  %v87 = vld [vmem:[%s51 + $0x30] sm:$0xff]
  %v88 = vld [vmem:[%s51 + $0x38] sm:$0xff]
  %v89 = vsub.f32 %v73, %v81
  %v90 = vsub.f32 %v74, %v82
  %v91 = vsub.f32 %v75, %v83
  %v92 = vsub.f32 %v76, %v84
  %v93 = vsub.f32 %v77, %v85
  %v94 = vsub.f32 %v78, %v86
  %v95 = vsub.f32 %v79, %v87
  %v96 = vsub.f32 %v80, %v88
  %v97 = vmul.f32 %v89, %v89
  %v98 = vmul.f32 %v90, %v90
  %v99 = vmul.f32 %v91, %v91
  %v100 = vmul.f32 %v92, %v92
  %v101 = vmul.f32 %v93, %v93
  %v102 = vmul.f32 %v94, %v94
  %v103 = vmul.f32 %v95, %v95
  %v104 = vmul.f32 %v96, %v96
  %v105 = vadd.f32 %v97, 1.0
  %v106 = vadd.f32 %v98, 1.0
  %v107 = vadd.f32 %v99, 1.0
  %v108 = vadd.f32 %v100, 1.0
  %v109 = vadd.f32 %v101, 1.0
  %v110 = vadd.f32 %v102, 1.0
  %v111 = vadd.f32 %v103, 1.0
  %v112 = vadd.f32 %v104, 1.0
  %v113 = vlog2.pop %v105
  %v114 = vmul.f32 %v113, 0.6931472
  %v115 = vlog2.pop %v106
  %v116 = vmul.f32 %v115, 0.6931472
  %v117 = vlog2.pop %v107
  %v118 = vmul.f32 %v117, 0.6931472
  %v119 = vlog2.pop %v108
  %v120 = vmul.f32 %v119, 0.6931472
  %v121 = vlog2.pop %v109
  %v122 = vmul.f32 %v121, 0.6931472
  %v123 = vlog2.pop %v110
  %v124 = vmul.f32 %v123, 0.6931472
  %v125 = vlog2.pop %v111
  %v126 = vmul.f32 %v125, 0.6931472
  %v127 = vlog2.pop %v112
  %v128 = vmul.f32 %v127, 0.6931472
  %v129 = vmul.f32 %v73, %v81
  %v130 = vmul.f32 %v74, %v82
  %v131 = vmul.f32 %v75, %v83
  %v132 = vmul.f32 %v76, %v84
  %v133 = vmul.f32 %v77, %v85
  %v134 = vmul.f32 %v78, %v86
  %v135 = vmul.f32 %v79, %v87
  %v136 = vmul.f32 %v80, %v88
  %vm137 = vcmp.gt.f32.partialorder %v129, 0.0
  %vm138 = vcmp.gt.f32.partialorder %v130, 0.0
  %vm139 = vcmp.gt.f32.partialorder %v131, 0.0
  %vm140 = vcmp.gt.f32.partialorder %v132, 0.0
  %vm141 = vcmp.gt.f32.partialorder %v133, 0.0
  %vm142 = vcmp.gt.f32.partialorder %v134, 0.0
  %vm143 = vcmp.gt.f32.partialorder %v135, 0.0
  %vm144 = vcmp.gt.f32.partialorder %v136, 0.0
  %vm145 = vcmp.eq.f32.partialorder %v73, 0.0
  %vm146 = vcmp.eq.f32.partialorder %v74, 0.0
  %vm147 = vcmp.eq.f32.partialorder %v75, 0.0
  %vm148 = vcmp.eq.f32.partialorder %v76, 0.0
  %vm149 = vcmp.eq.f32.partialorder %v77, 0.0
  %vm150 = vcmp.eq.f32.partialorder %v78, 0.0
  %vm151 = vcmp.eq.f32.partialorder %v79, 0.0
  %vm152 = vcmp.eq.f32.partialorder %v80, 0.0
  %vm153 = vcmp.eq.f32.partialorder %v81, 0.0
  %vm154 = vcmp.eq.f32.partialorder %v82, 0.0
  %vm155 = vcmp.eq.f32.partialorder %v83, 0.0
  %vm156 = vcmp.eq.f32.partialorder %v84, 0.0
  %vm157 = vcmp.eq.f32.partialorder %v85, 0.0
  %vm158 = vcmp.eq.f32.partialorder %v86, 0.0
  %vm159 = vcmp.eq.f32.partialorder %v87, 0.0
  %vm160 = vcmp.eq.f32.partialorder %v88, 0.0
  %vm161 = vmand %vm145, %vm153
  %vm162 = vmand %vm146, %vm154
  %vm163 = vmand %vm147, %vm155
  %vm164 = vmand %vm148, %vm156
  %vm165 = vmand %vm149, %vm157
  %vm166 = vmand %vm150, %vm158
  %vm167 = vmand %vm151, %vm159
  %vm168 = vmand %vm152, %vm160
  %vm169 = vmor %vm137, %vm161
  %vm170 = vmor %vm138, %vm162
  %vm171 = vmor %vm139, %vm163
  %vm172 = vmor %vm140, %vm164
  %vm173 = vmor %vm141, %vm165
  %vm174 = vmor %vm142, %vm166
  %vm175 = vmor %vm143, %vm167
  %vm176 = vmor %vm144, %vm168
  %v177 = vsel %vm169, 1.0, 0.0
  %v178 = vsel %vm170, 1.0, 0.0
  %v179 = vsel %vm171, 1.0, 0.0
  %v180 = vsel %vm172, 1.0, 0.0
  %v181 = vsel %vm173, 1.0, 0.0
  %v182 = vsel %vm174, 1.0, 0.0
  %v183 = vsel %vm175, 1.0, 0.0
  %v184 = vsel %vm176, 1.0, 0.0
  %v185 = vld [vmem:[%s2] sm:$0xff]
  %v186 = vld [vmem:[%s2 + $0x8] sm:$0xff]
  %v187 = vld [vmem:[%s2 + $0x10] sm:$0xff]
  %v188 = vld [vmem:[%s2 + $0x18] sm:$0xff]
  %v189 = vld [vmem:[%s2 + $0x20] sm:$0xff]
  %v190 = vld [vmem:[%s2 + $0x28] sm:$0xff]
  %v191 = vld [vmem:[%s2 + $0x30] sm:$0xff]
  %v192 = vld [vmem:[%s2 + $0x38] sm:$0xff]
  %v193 = vadd.f32 %v114, 0.0
  %v194 = vadd.f32 %v116, 0.0
  %v195 = vadd.f32 %v118, 0.0
  %v196 = vadd.f32 %v120, 0.0
  %v197 = vadd.f32 %v122, 0.0
  %v198 = vadd.f32 %v124, 0.0
  %v199 = vadd.f32 %v126, 0.0
  %v200 = vadd.f32 %v128, 0.0
  %v201 = vadd.f32 %v185, %v193
  %v202 = vadd.f32 %v186, %v194
  %v203 = vadd.f32 %v187, %v195
  %v204 = vadd.f32 %v188, %v196
  %v205 = vadd.f32 %v189, %v197
  %v206 = vadd.f32 %v190, %v198
  %v207 = vadd.f32 %v191, %v199
  %v208 = vadd.f32 %v192, %v200
  %209 = vst [vmem:[%s2] sm:$0xff] %v201
  %210 = vst [vmem:[%s2 + $0x8] sm:$0xff] %v202
  %211 = vst [vmem:[%s2 + $0x10] sm:$0xff] %v203
  %212 = vst [vmem:[%s2 + $0x18] sm:$0xff] %v204
  %213 = vst [vmem:[%s2 + $0x20] sm:$0xff] %v205
  %214 = vst [vmem:[%s2 + $0x28] sm:$0xff] %v206
  %215 = vst [vmem:[%s2 + $0x30] sm:$0xff] %v207
  %216 = vst [vmem:[%s2 + $0x38] sm:$0xff] %v208
  %v217 = vld [vmem:[%s3] sm:$0xff]
  %v218 = vld [vmem:[%s3 + $0x8] sm:$0xff]
  %v219 = vld [vmem:[%s3 + $0x10] sm:$0xff]
  %v220 = vld [vmem:[%s3 + $0x18] sm:$0xff]
  %v221 = vld [vmem:[%s3 + $0x20] sm:$0xff]
  %v222 = vld [vmem:[%s3 + $0x28] sm:$0xff]
  %v223 = vld [vmem:[%s3 + $0x30] sm:$0xff]
  %v224 = vld [vmem:[%s3 + $0x38] sm:$0xff]
  %v225 = vadd.f32 %v177, 0.0
  %v226 = vadd.f32 %v178, 0.0
  %v227 = vadd.f32 %v179, 0.0
  %v228 = vadd.f32 %v180, 0.0
  %v229 = vadd.f32 %v181, 0.0
  %v230 = vadd.f32 %v182, 0.0
  %v231 = vadd.f32 %v183, 0.0
  %v232 = vadd.f32 %v184, 0.0
  %v233 = vadd.f32 %v217, %v225
  %v234 = vadd.f32 %v218, %v226
  %v235 = vadd.f32 %v219, %v227
  %v236 = vadd.f32 %v220, %v228
  %v237 = vadd.f32 %v221, %v229
  %v238 = vadd.f32 %v222, %v230
  %v239 = vadd.f32 %v223, %v231
  %v240 = vadd.f32 %v224, %v232
  %241 = vst [vmem:[%s3] sm:$0xff] %v233
  %242 = vst [vmem:[%s3 + $0x8] sm:$0xff] %v234
  %243 = vst [vmem:[%s3 + $0x10] sm:$0xff] %v235
  %244 = vst [vmem:[%s3 + $0x18] sm:$0xff] %v236
  %245 = vst [vmem:[%s3 + $0x20] sm:$0xff] %v237
  %246 = vst [vmem:[%s3 + $0x28] sm:$0xff] %v238
  %247 = vst [vmem:[%s3 + $0x30] sm:$0xff] %v239
  %248 = vst [vmem:[%s3 + $0x38] sm:$0xff] %v240
  // Predicated region
  $region14: #{_my_loss_impl.1} parent=0 // pred_check
    _
  $region15: #{_my_loss_impl.1} parent=0 // pred_check_branch
    %250 = sbr.rel (0) target = $region17
  $region16: #{_my_loss_impl.1} parent=0 // pred_region
    _
  $region17: #{_my_loss_impl.1} parent=0 // pred_fallthru
    _
  // Predicated region
  $region18: #{_my_loss_impl.1} parent=0 // pred_check
    _
  $region19: #{_my_loss_impl.1} parent=0 // pred_check_branch
    %252 = sbr.rel (0) target = $region21
  $region20: #{_my_loss_impl.1} parent=0 // pred_region
    _
  $region21: #{_my_loss_impl.1} parent=0 // pred_fallthru
    _
  // Predicated region
  $region22: #{_my_loss_impl.1} parent=0 // pred_check
    _
  $region23: #{_my_loss_impl.1} parent=0 // pred_check_branch
    %254 = sbr.rel (0) target = $region25
  $region24: #{_my_loss_impl.1} parent=0 // pred_region
    _
  $region25: #{_my_loss_impl.1} parent=0 // pred_fallthru
    _
  // Predicated region
  $region26: #{_my_loss_impl.1} parent=0 // pred_check
    _
  $region27: #{_my_loss_impl.1} parent=0 // pred_check_branch
    %256 = sbr.rel (0) target = $region29
  $region28: #{_my_loss_impl.1} parent=0 // pred_region
    _
  $region29: #{_my_loss_impl.1} parent=0 // pred_fallthru
    _

</llo_original>
